<compile_context>
chip_gen: v6e
topology: v6e:2x2x1
jax: 0.10.0
libtpu: 0.0.40
codegen_flags: <defaults>
</compile_context>

<pallas_src>
import math

import jax
import jax.numpy as jnp
from jax.experimental import pallas as pl
from jax.experimental.pallas import tpu as pltpu


def actor_kernel(obs_ref, act_ref,
                 w1t_ref, b1_ref, w2t_ref, b2_ref,
                 w3t_ref, b3_ref, w4t_ref, b4_ref,
                 eye_act_ref, nhiv_row_ref, logp_const_ref,
                 mu_t_ref, logp_t_ref):
    # Contraction patterns Mosaic lowers natively on the MXU:
    NT = (((1,), (1,)), ((), ()))   # A @ B^T   (rhs transposed)
    NN = (((1,), (0,)), ((), ()))   # A @ B     (standard)

    x = obs_ref[...]                                             # (tile_b, obs_dim)

    # Layer 1 folds the batch transpose into a single NT matmul:
    #   h1^T = relu(W1^T @ x^T + b1)                             (32, tile_b)
    h = jax.lax.dot_general(w1t_ref[...], x, NT,
                            preferred_element_type=jnp.float32)
    h = jnp.maximum(h + b1_ref[...], 0.0)
    h = jax.lax.dot_general(w2t_ref[...], h, NN,
                            preferred_element_type=jnp.float32)
    h = jnp.maximum(h + b2_ref[...], 0.0)                        # (64, tile_b)
    h = jax.lax.dot_general(w3t_ref[...], h, NN,
                            preferred_element_type=jnp.float32)
    h = jnp.maximum(h + b3_ref[...], 0.0)                        # (32, tile_b)
    mu_t = jnp.tanh(
        jax.lax.dot_general(w4t_ref[...], h, NN,
                            preferred_element_type=jnp.float32)
        + b4_ref[...])                                           # (act_dim, tile_b)
    mu_t_ref[...] = mu_t                                         # lane-dense store

    # act^T via an identity NT matmul (bit-exact; avoids an explicit
    # lane<->sublane relayout of the streamed (tile_b, act_dim) block).
    act_t = jax.lax.dot_general(eye_act_ref[...], act_ref[...], NT,
                                preferred_element_type=jnp.float32)  # (act_dim, tile_b)

    # Normal(mu, exp(log_std)).log_prob(act).sum(-1), constants hoisted:
    #   nhiv_row   = -0.5 * exp(-2 * log_std)           (1, act_dim)
    #   logp_const = sum(-(log_std + 0.5*log(2*pi)))    (1, 1)
    d = act_t - mu_t
    logp_t = jax.lax.dot_general(nhiv_row_ref[...], d * d, NN,
                                 preferred_element_type=jnp.float32)  # (1, tile_b)
    logp_t_ref[...] = logp_t + logp_const_ref[...]               # lane-dense store


def _round_up(x, m):
    return ((x + m - 1) // m) * m


def _pick_tile_b(batch, tile_b):
    """Lane-dense batch tile: multiple of 128, large enough to amortize the
    per-grid-step overhead, and (when the batch allows) >= 2 grid steps so the
    'parallel' axis can be split across v7x's two TensorCores."""
    tb = min(tile_b, _round_up(batch, 128))
    tb = _round_up(max(tb, 1), 128)
    if batch > 256 and pl.cdiv(batch, tb) < 2:
        tb = _round_up(pl.cdiv(batch, 2), 128)
    return tb


def actor_forward(obs, act, params, *, tile_b=2048):
    """Returns (mu, log_prob). obs: (B, obs_dim) f32, act: (B, act_dim) f32."""
    B, obs_dim = obs.shape
    act_dim = act.shape[-1]

    w1, b1, w2, b2, w3, b3, w4, b4, log_std = params

    # Batch-on-lanes layout: pre-transpose the tiny weights once; biases and
    # log_std constants become columns/rows that broadcast over the lane axis.
    w1t, w2t, w3t, w4t = w1.T, w2.T, w3.T, w4.T
    b1c = b1.reshape(-1, 1)
    b2c = b2.reshape(-1, 1)
    b3c = b3.reshape(-1, 1)
    b4c = b4.reshape(-1, 1)
    eye_act = jnp.eye(act_dim, dtype=jnp.float32)
    nhiv_row = (-0.5 * jnp.exp(-2.0 * log_std)).reshape(1, act_dim).astype(jnp.float32)
    logp_const = jnp.sum(-(log_std + 0.5 * math.log(2.0 * math.pi)))
    logp_const = logp_const.reshape(1, 1).astype(jnp.float32)

    tb = _pick_tile_b(B, tile_b)
    num_blocks = pl.cdiv(B, tb)      # ragged tail handled as a partial block

    def stream_spec(dim):
        # Streamed, double-buffered batch blocks (batch on sublanes in HBM).
        return pl.BlockSpec((tb, dim), lambda i: (i, 0))

    def resident(arr):
        # Whole array, same block every step -> DMA'd once, VMEM-resident.
        return pl.BlockSpec(arr.shape, lambda i: (0, 0))

    in_specs = [
        stream_spec(obs_dim),            # obs
        stream_spec(act_dim),            # act
        resident(w1t), resident(b1c),
        resident(w2t), resident(b2c),
        resident(w3t), resident(b3c),
        resident(w4t), resident(b4c),
        resident(eye_act), resident(nhiv_row), resident(logp_const),
    ]
    out_specs = (
        pl.BlockSpec((act_dim, tb), lambda i: (0, i)),   # mu^T, lane-dense
        pl.BlockSpec((1, tb), lambda i: (0, i)),         # logp, lane-dense
    )

    flops = 2 * B * (obs_dim * 32 + 32 * 64 + 64 * 32 + 32 * act_dim
                     + act_dim * act_dim + act_dim)
    bytes_accessed = 4 * B * (obs_dim + 2 * act_dim + 1)
    cost = pl.CostEstimate(flops=flops, transcendentals=B * act_dim,
                           bytes_accessed=bytes_accessed)

    mu_t, logp_t = pl.pallas_call(
        actor_kernel,
        out_shape=(
            jax.ShapeDtypeStruct((act_dim, B), jnp.float32),
            jax.ShapeDtypeStruct((1, B), jnp.float32),
        ),
        grid=(num_blocks,),
        in_specs=in_specs,
        out_specs=out_specs,
        compiler_params=pltpu.CompilerParams(
            dimension_semantics=("parallel",)),          # v7x megacore sharding
        cost_estimate=cost,
    )(obs, act, w1t, b1c, w2t, b2c, w3t, b3c, w4t, b4c,
      eye_act, nhiv_row, logp_const)

    # mu^T is tiny (act_dim x B); one cheap XLA transpose restores the
    # reference (B, act_dim) layout.  logp is already a dense (1, B) slab.
    return mu_t.T, logp_t[0]


def init_params(key, obs_dim, act_dim):
    """Deterministic synthetic init matching the PyTorch module's shapes."""
    dims = [(obs_dim, 32), (32, 64), (64, 32), (32, act_dim)]
    params = []
    for (fan_in, fan_out) in dims:
        key, kw, kb = jax.random.split(key, 3)
        bound = 1.0 / math.sqrt(fan_in)
        w = jax.random.uniform(kw, (fan_in, fan_out), jnp.float32, -bound, bound)
        b = jax.random.uniform(kb, (fan_out,), jnp.float32, -bound, bound)
        params += [w, b]
    log_std = jnp.full((act_dim,), -0.5, dtype=jnp.float32)  # -0.5 * ones(act_dim)
    params.append(log_std)
    return tuple(params)


def actor_forward_ref(obs, act, params):
    """Pure-JAX reference (full-f32 matmuls) for correctness checking."""
    w1, b1, w2, b2, w3, b3, w4, b4, log_std = params
    hp = jax.lax.Precision.HIGHEST
    h = jnp.maximum(jnp.dot(obs, w1, precision=hp) + b1, 0.0)
    h = jnp.maximum(jnp.dot(h, w2, precision=hp) + b2, 0.0)
    h = jnp.maximum(jnp.dot(h, w3, precision=hp) + b3, 0.0)
    mu = jnp.tanh(jnp.dot(h, w4, precision=hp) + b4)
    std = jnp.exp(log_std)
    z = (act - mu) / std
    lp = -0.5 * z * z - log_std - 0.5 * math.log(2.0 * math.pi)
    return mu, jnp.sum(lp, axis=-1)


if __name__ == "__main__":
    key = jax.random.PRNGKey(0)
    k_params, k_obs, k_act, k_obs2, k_act2 = jax.random.split(key, 5)

    obs_dim, act_dim = 16, 8
    params = init_params(k_params, obs_dim, act_dim)

    # Small demo batch (single partial block).
    B = 8
    obs = jax.random.normal(k_obs, (B, obs_dim), jnp.float32)
    act = jax.random.normal(k_act, (B, act_dim), jnp.float32)

    mu, log_prob = actor_forward(obs, act, params)
    jax.block_until_ready((mu, log_prob))

    mu_ref, lp_ref = actor_forward_ref(obs, act, params)
    assert mu.shape == (B, act_dim) and log_prob.shape == (B,)
    assert jnp.allclose(mu, mu_ref, atol=3e-5, rtol=1e-5)
    assert jnp.allclose(log_prob, lp_ref, atol=3e-4, rtol=1e-5)

    # Multi-block grid with a ragged tail (exercises partial blocks with no
    # wrapper-side padding copies, and a >=2-step parallel grid axis).
    B2 = 1000
    obs2 = jax.random.normal(k_obs2, (B2, obs_dim), jnp.float32)
    act2 = jax.random.normal(k_act2, (B2, act_dim), jnp.float32)

    mu2, lp2 = actor_forward(obs2, act2, params)
    jax.block_until_ready((mu2, lp2))

    mu2_ref, lp2_ref = actor_forward_ref(obs2, act2, params)
    assert mu2.shape == (B2, act_dim) and lp2.shape == (B2,)
    assert jnp.allclose(mu2, mu2_ref, atol=3e-5, rtol=1e-5)
    assert jnp.allclose(lp2, lp2_ref, atol=3e-4, rtol=1e-5)

    print("KERNEL_OK")
</pallas_src>

<mosaic_0001>
module attributes {stable_mosaic.version = 11 : i64} {
  func.func @actor_kernel(%arg0: i32, %arg1: memref<128x16xf32, #tpu.memory_space<vmem>>, %arg2: memref<128x8xf32, #tpu.memory_space<vmem>>, %arg3: memref<32x16xf32, #tpu.memory_space<vmem>>, %arg4: memref<32x1xf32, #tpu.memory_space<vmem>>, %arg5: memref<64x32xf32, #tpu.memory_space<vmem>>, %arg6: memref<64x1xf32, #tpu.memory_space<vmem>>, %arg7: memref<32x64xf32, #tpu.memory_space<vmem>>, %arg8: memref<32x1xf32, #tpu.memory_space<vmem>>, %arg9: memref<8x32xf32, #tpu.memory_space<vmem>>, %arg10: memref<8x1xf32, #tpu.memory_space<vmem>>, %arg11: memref<8x8xf32, #tpu.memory_space<vmem>>, %arg12: memref<1x8xf32, #tpu.memory_space<vmem>>, %arg13: memref<1x1xf32, #tpu.memory_space<vmem>>, %arg14: memref<8x128xf32, #tpu.memory_space<vmem>>, %arg15: memref<1x128xf32, #tpu.memory_space<vmem>>) attributes {dimension_semantics = [#tpu.dimension_semantics<parallel>], iteration_bounds = array<i64: 1>, scalar_prefetch = 0 : i64, scratch_operands = 0 : i64, tpu.core_type = #tpu.core_type<tc>, window_params = [{transform_indices = @transform_0, window_bounds = array<i64: 128, 16>}, {transform_indices = @transform_1, window_bounds = array<i64: 128, 8>}, {pipeline_mode = #tpu.pipeline_mode<synchronous>, transform_indices = @transform_2, window_bounds = array<i64: 32, 16>}, {pipeline_mode = #tpu.pipeline_mode<synchronous>, transform_indices = @transform_3, window_bounds = array<i64: 32, 1>}, {pipeline_mode = #tpu.pipeline_mode<synchronous>, transform_indices = @transform_4, window_bounds = array<i64: 64, 32>}, {pipeline_mode = #tpu.pipeline_mode<synchronous>, transform_indices = @transform_5, window_bounds = array<i64: 64, 1>}, {pipeline_mode = #tpu.pipeline_mode<synchronous>, transform_indices = @transform_6, window_bounds = array<i64: 32, 64>}, {pipeline_mode = #tpu.pipeline_mode<synchronous>, transform_indices = @transform_7, window_bounds = array<i64: 32, 1>}, {pipeline_mode = #tpu.pipeline_mode<synchronous>, transform_indices = @transform_8, window_bounds = array<i64: 8, 32>}, {pipeline_mode = #tpu.pipeline_mode<synchronous>, transform_indices = @transform_9, window_bounds = array<i64: 8, 1>}, {pipeline_mode = #tpu.pipeline_mode<synchronous>, transform_indices = @transform_10, window_bounds = array<i64: 8, 8>}, {pipeline_mode = #tpu.pipeline_mode<synchronous>, transform_indices = @transform_11, window_bounds = array<i64: 1, 8>}, {pipeline_mode = #tpu.pipeline_mode<synchronous>, transform_indices = @transform_12, window_bounds = array<i64: 1, 1>}, {transform_indices = @transform_13, window_bounds = array<i64: 8, 128>}, {transform_indices = @transform_14, window_bounds = array<i64: 1, 128>}]} {
    %c0 = arith.constant 0 : index
    %c0_0 = arith.constant 0 : index
    %0 = vector.load %arg1[%c0, %c0_0] : memref<128x16xf32, #tpu.memory_space<vmem>>, vector<128x16xf32>
    %c0_1 = arith.constant 0 : index
    %c0_2 = arith.constant 0 : index
    %1 = vector.load %arg3[%c0_1, %c0_2] : memref<32x16xf32, #tpu.memory_space<vmem>>, vector<32x16xf32>
    %cst = arith.constant dense<0.000000e+00> : vector<32x128xf32>
    %2 = tpu.matmul %1, %0, %cst {dimension_numbers = #tpu.dot_dimension_numbers<[1], [1], [0], [0], [0, 0, 1, 0], [], []>} : vector<32x16xf32>, vector<128x16xf32>, vector<32x128xf32> -> vector<32x128xf32>
    %c0_3 = arith.constant 0 : index
    %c0_4 = arith.constant 0 : index
    %3 = vector.load %arg4[%c0_3, %c0_4] : memref<32x1xf32, #tpu.memory_space<vmem>>, vector<32x1xf32>
    %4 = vector.broadcast %3 : vector<32x1xf32> to vector<32x128xf32>
    %5 = arith.addf %2, %4 : vector<32x128xf32>
    %cst_5 = arith.constant 0.000000e+00 : f32
    %6 = vector.broadcast %cst_5 : f32 to vector<32x128xf32>
    %7 = arith.maximumf %5, %6 : vector<32x128xf32>
    %c0_6 = arith.constant 0 : index
    %c0_7 = arith.constant 0 : index
    %8 = vector.load %arg5[%c0_6, %c0_7] : memref<64x32xf32, #tpu.memory_space<vmem>>, vector<64x32xf32>
    %cst_8 = arith.constant dense<0.000000e+00> : vector<64x128xf32>
    %9 = tpu.matmul %8, %7, %cst_8 {dimension_numbers = #tpu.dot_dimension_numbers<[1], [0], [0], [1], [0, 0, 1, 1], [], []>} : vector<64x32xf32>, vector<32x128xf32>, vector<64x128xf32> -> vector<64x128xf32>
    %c0_9 = arith.constant 0 : index
    %c0_10 = arith.constant 0 : index
    %10 = vector.load %arg6[%c0_9, %c0_10] : memref<64x1xf32, #tpu.memory_space<vmem>>, vector<64x1xf32>
    %11 = vector.broadcast %10 : vector<64x1xf32> to vector<64x128xf32>
    %12 = arith.addf %9, %11 : vector<64x128xf32>
    %cst_11 = arith.constant 0.000000e+00 : f32
    %13 = vector.broadcast %cst_11 : f32 to vector<64x128xf32>
    %14 = arith.maximumf %12, %13 : vector<64x128xf32>
    %c0_12 = arith.constant 0 : index
    %c0_13 = arith.constant 0 : index
    %15 = vector.load %arg7[%c0_12, %c0_13] : memref<32x64xf32, #tpu.memory_space<vmem>>, vector<32x64xf32>
    %cst_14 = arith.constant dense<0.000000e+00> : vector<32x128xf32>
    %16 = tpu.matmul %15, %14, %cst_14 {dimension_numbers = #tpu.dot_dimension_numbers<[1], [0], [0], [1], [0, 0, 1, 1], [], []>} : vector<32x64xf32>, vector<64x128xf32>, vector<32x128xf32> -> vector<32x128xf32>
    %c0_15 = arith.constant 0 : index
    %c0_16 = arith.constant 0 : index
    %17 = vector.load %arg8[%c0_15, %c0_16] : memref<32x1xf32, #tpu.memory_space<vmem>>, vector<32x1xf32>
    %18 = vector.broadcast %17 : vector<32x1xf32> to vector<32x128xf32>
    %19 = arith.addf %16, %18 : vector<32x128xf32>
    %cst_17 = arith.constant 0.000000e+00 : f32
    %20 = vector.broadcast %cst_17 : f32 to vector<32x128xf32>
    %21 = arith.maximumf %19, %20 : vector<32x128xf32>
    %c0_18 = arith.constant 0 : index
    %c0_19 = arith.constant 0 : index
    %22 = vector.load %arg9[%c0_18, %c0_19] : memref<8x32xf32, #tpu.memory_space<vmem>>, vector<8x32xf32>
    %cst_20 = arith.constant dense<0.000000e+00> : vector<8x128xf32>
    %23 = tpu.matmul %22, %21, %cst_20 {dimension_numbers = #tpu.dot_dimension_numbers<[1], [0], [0], [1], [0, 0, 1, 1], [], []>} : vector<8x32xf32>, vector<32x128xf32>, vector<8x128xf32> -> vector<8x128xf32>
    %c0_21 = arith.constant 0 : index
    %c0_22 = arith.constant 0 : index
    %24 = vector.load %arg10[%c0_21, %c0_22] : memref<8x1xf32, #tpu.memory_space<vmem>>, vector<8x1xf32>
    %25 = vector.broadcast %24 : vector<8x1xf32> to vector<8x128xf32>
    %26 = arith.addf %23, %25 : vector<8x128xf32>
    %27 = math.tanh %26 : vector<8x128xf32>
    %c0_23 = arith.constant 0 : index
    %c0_24 = arith.constant 0 : index
    %28 = vector.load %arg14[%c0_23, %c0_24] : memref<8x128xf32, #tpu.memory_space<vmem>>, vector<8x128xf32>
    tpu.vector_store %arg14[%c0_23, %c0_24], %27 {strides = array<i32>} : memref<8x128xf32, #tpu.memory_space<vmem>>, vector<8x128xf32>,
    %c0_25 = arith.constant 0 : index
    %c0_26 = arith.constant 0 : index
    %29 = vector.load %arg11[%c0_25, %c0_26] : memref<8x8xf32, #tpu.memory_space<vmem>>, vector<8x8xf32>
    %c0_27 = arith.constant 0 : index
    %c0_28 = arith.constant 0 : index
    %30 = vector.load %arg2[%c0_27, %c0_28] : memref<128x8xf32, #tpu.memory_space<vmem>>, vector<128x8xf32>
    %cst_29 = arith.constant dense<0.000000e+00> : vector<8x128xf32>
    %31 = tpu.matmul %29, %30, %cst_29 {dimension_numbers = #tpu.dot_dimension_numbers<[1], [1], [0], [0], [0, 0, 1, 0], [], []>} : vector<8x8xf32>, vector<128x8xf32>, vector<8x128xf32> -> vector<8x128xf32>
    %32 = arith.subf %31, %27 : vector<8x128xf32>
    %c0_30 = arith.constant 0 : index
    %c0_31 = arith.constant 0 : index
    %33 = vector.load %arg12[%c0_30, %c0_31] : memref<1x8xf32, #tpu.memory_space<vmem>>, vector<1x8xf32>
    %34 = arith.mulf %32, %32 : vector<8x128xf32>
    %cst_32 = arith.constant dense<0.000000e+00> : vector<1x128xf32>
    %35 = tpu.matmul %33, %34, %cst_32 {dimension_numbers = #tpu.dot_dimension_numbers<[1], [0], [0], [1], [0, 0, 1, 1], [], []>} : vector<1x8xf32>, vector<8x128xf32>, vector<1x128xf32> -> vector<1x128xf32>
    %c0_33 = arith.constant 0 : index
    %c0_34 = arith.constant 0 : index
    %36 = vector.load %arg13[%c0_33, %c0_34] : memref<1x1xf32, #tpu.memory_space<vmem>>, vector<1x1xf32>
    %37 = vector.broadcast %36 : vector<1x1xf32> to vector<1x128xf32>
    %38 = arith.addf %35, %37 : vector<1x128xf32>
    %c0_35 = arith.constant 0 : index
    %c0_36 = arith.constant 0 : index
    %39 = vector.load %arg15[%c0_35, %c0_36] : memref<1x128xf32, #tpu.memory_space<vmem>>, vector<1x128xf32>
    tpu.vector_store %arg15[%c0_35, %c0_36], %38 {strides = array<i32>} : memref<1x128xf32, #tpu.memory_space<vmem>>, vector<1x128xf32>,
    return
  }
  func.func @transform_0(%arg0: i32) -> (i32, i32) {
    %c0_i32 = arith.constant 0 : i32
    %c0_i32_0 = arith.constant 0 : i32
    return %arg0, %c0_i32 : i32, i32
  }
  func.func @transform_1(%arg0: i32) -> (i32, i32) {
    %c0_i32 = arith.constant 0 : i32
    %c0_i32_0 = arith.constant 0 : i32
    return %arg0, %c0_i32 : i32, i32
  }
  func.func @transform_2(%arg0: i32) -> (i32, i32) {
    %c0_i32 = arith.constant 0 : i32
    %c0_i32_0 = arith.constant 0 : i32
    %c0_i32_1 = arith.constant 0 : i32
    return %c0_i32, %c0_i32_0 : i32, i32
  }
  func.func @transform_3(%arg0: i32) -> (i32, i32) {
    %c0_i32 = arith.constant 0 : i32
    %c0_i32_0 = arith.constant 0 : i32
    %c0_i32_1 = arith.constant 0 : i32
    return %c0_i32, %c0_i32_0 : i32, i32
  }
  func.func @transform_4(%arg0: i32) -> (i32, i32) {
    %c0_i32 = arith.constant 0 : i32
    %c0_i32_0 = arith.constant 0 : i32
    %c0_i32_1 = arith.constant 0 : i32
    return %c0_i32, %c0_i32_0 : i32, i32
  }
  func.func @transform_5(%arg0: i32) -> (i32, i32) {
    %c0_i32 = arith.constant 0 : i32
    %c0_i32_0 = arith.constant 0 : i32
    %c0_i32_1 = arith.constant 0 : i32
    return %c0_i32, %c0_i32_0 : i32, i32
  }
  func.func @transform_6(%arg0: i32) -> (i32, i32) {
    %c0_i32 = arith.constant 0 : i32
    %c0_i32_0 = arith.constant 0 : i32
    %c0_i32_1 = arith.constant 0 : i32
    return %c0_i32, %c0_i32_0 : i32, i32
  }
  func.func @transform_7(%arg0: i32) -> (i32, i32) {
    %c0_i32 = arith.constant 0 : i32
    %c0_i32_0 = arith.constant 0 : i32
    %c0_i32_1 = arith.constant 0 : i32
    return %c0_i32, %c0_i32_0 : i32, i32
  }
  func.func @transform_8(%arg0: i32) -> (i32, i32) {
    %c0_i32 = arith.constant 0 : i32
    %c0_i32_0 = arith.constant 0 : i32
    %c0_i32_1 = arith.constant 0 : i32
    return %c0_i32, %c0_i32_0 : i32, i32
  }
  func.func @transform_9(%arg0: i32) -> (i32, i32) {
    %c0_i32 = arith.constant 0 : i32
    %c0_i32_0 = arith.constant 0 : i32
    %c0_i32_1 = arith.constant 0 : i32
    return %c0_i32, %c0_i32_0 : i32, i32
  }
  func.func @transform_10(%arg0: i32) -> (i32, i32) {
    %c0_i32 = arith.constant 0 : i32
    %c0_i32_0 = arith.constant 0 : i32
    %c0_i32_1 = arith.constant 0 : i32
    return %c0_i32, %c0_i32_0 : i32, i32
  }
  func.func @transform_11(%arg0: i32) -> (i32, i32) {
    %c0_i32 = arith.constant 0 : i32
    %c0_i32_0 = arith.constant 0 : i32
    %c0_i32_1 = arith.constant 0 : i32
    return %c0_i32, %c0_i32_0 : i32, i32
  }
  func.func @transform_12(%arg0: i32) -> (i32, i32) {
    %c0_i32 = arith.constant 0 : i32
    %c0_i32_0 = arith.constant 0 : i32
    %c0_i32_1 = arith.constant 0 : i32
    return %c0_i32, %c0_i32_0 : i32, i32
  }
  func.func @transform_13(%arg0: i32) -> (i32, i32) {
    %c0_i32 = arith.constant 0 : i32
    %c0_i32_0 = arith.constant 0 : i32
    return %c0_i32, %arg0 : i32, i32
  }
  func.func @transform_14(%arg0: i32) -> (i32, i32) {
    %c0_i32 = arith.constant 0 : i32
    %c0_i32_0 = arith.constant 0 : i32
    return %c0_i32, %arg0 : i32, i32
  }
}

</mosaic_0001>

<llo_original>
// kernel: tpu_custom_call.1
$region0: #{tpu_custom_call.1}
  #allocation0 [shape = 'u32[]', space=smem, size = 0x4, offset = 0x4, fixed_abs, tag = 'smem constant byte address 0x4 - core index']
  #allocation1 [shape = 'u32[144,128]{1,0:T(1,128)}', space=vmem, size = 0x12000, scoped, tag = 'internal scratch']
  #allocation2 [shape = 'f32[1,1]{1,0:T(1,128)S(1)}', space=vmem, size = 0x200, scoped, tag = 'scoped memory for tpu_custom_call.1']
  %s0 = inlined_call_operand.vmem [shape: f32[8,16], index: 0, kind: input, shape index: {}]
  %s1 = inlined_call_operand.vmem [shape: f32[8,8], index: 1, kind: input, shape index: {}]
  %s2 = inlined_call_operand.vmem [shape: f32[32,16], index: 2, kind: input, shape index: {}]
  %s3 = inlined_call_operand.vmem [shape: f32[32,1], index: 3, kind: input, shape index: {}]
  %s4 = inlined_call_operand.vmem [shape: f32[64,32], index: 4, kind: input, shape index: {}]
  %s5 = inlined_call_operand.vmem [shape: f32[64,1], index: 5, kind: input, shape index: {}]
  %s6 = inlined_call_operand.vmem [shape: f32[32,64], index: 6, kind: input, shape index: {}]
  %s7 = inlined_call_operand.vmem [shape: f32[32,1], index: 7, kind: input, shape index: {}]
  %s8 = inlined_call_operand.vmem [shape: f32[8,32], index: 8, kind: input, shape index: {}]
  %s9 = inlined_call_operand.vmem [shape: f32[8,1], index: 9, kind: input, shape index: {}]
  %s10 = inlined_call_operand.vmem [shape: f32[8,8], index: 10, kind: input, shape index: {}]
  %s11 = inlined_call_operand.vmem [shape: f32[1,8], index: 11, kind: input, shape index: {}]
  %s12 = inlined_call_operand.<no memory space> [shape: f32[1,1], index: 12, kind: input, shape index: {}]
  %s13 = inlined_call_operand.hbm [shape: f32[8,8], index: 13, kind: output, shape index: {0}]
  %s14 = inlined_call_operand.hbm [shape: f32[1,8], index: 14, kind: output, shape index: {1}]
  %15 = xla_tuple %s13, %s14
  %s16 = sld [smem:[#allocation0]]
  $region70: #{tpu_custom_call.1} parent=0
    _
  %s18 = ssub.s32 1, %s16
  %s19 = scalar_select 0, %s18, %s16
  %v20 = vstv %s12
  %21 = vst [vmem:[#allocation2] sm:$0x1] %v20
  $region1: #{tpu_custom_call.1} parent=0
    #allocation3 [shape = 'u8[4096]{0}', space=vmem, size = 0x1000, scoped, tag = 'output window, operand 0, single buffered']
    #allocation4 [shape = 's32[1]{0}', space=sflag, size = 0x4, scoped, tag = 'scoped memory for tpu_custom_call.1']
    #allocation5 [shape = 'u8[512]{0}', space=vmem, size = 0x400, scoped, tag = 'output window, operand 1, single buffered']
    #allocation6 [shape = 's32[1]{0}', space=sflag, size = 0x4, scoped, tag = 'scoped memory for tpu_custom_call.1']
    %22 = vsyncpa [#allocation4], 0
    %23 = vsyncpa [#allocation6], 0
    // Predicated region
    $region2: #{tpu_custom_call.1} parent=1 // pred_check
      _
    $region3: #{tpu_custom_call.1} parent=1 // pred_check_branch
      %25 = sbr.rel (0) target = $region5
    $region4: #{tpu_custom_call.1} parent=1 // pred_region
      _
    $region5: #{tpu_custom_call.1} parent=1 // pred_fallthru
      _
    // Predicated region
    $region6: #{tpu_custom_call.1} parent=1 // pred_check
      _
    $region7: #{tpu_custom_call.1} parent=1 // pred_check_branch
      %27 = sbr.rel (0) target = $region9
    $region8: #{tpu_custom_call.1} parent=1 // pred_region
      _
    $region9: #{tpu_custom_call.1} parent=1 // pred_fallthru
      _
    // Predicated region
    $region10: #{tpu_custom_call.1} parent=1 // pred_check
      _
    $region11: #{tpu_custom_call.1} parent=1 // pred_check_branch
      %29 = sbr.rel (0) target = $region13
    $region12: #{tpu_custom_call.1} parent=1 // pred_region
      _
    $region13: #{tpu_custom_call.1} parent=1 // pred_fallthru
      _
    // Predicated region
    $region14: #{tpu_custom_call.1} parent=1 // pred_check
      _
    $region15: #{tpu_custom_call.1} parent=1 // pred_check_branch
      %31 = sbr.rel (0) target = $region17
    $region16: #{tpu_custom_call.1} parent=1 // pred_region
      _
    $region17: #{tpu_custom_call.1} parent=1 // pred_fallthru
      _
    // Predicated region
    $region18: #{tpu_custom_call.1} parent=1 // pred_check
      _
    $region19: #{tpu_custom_call.1} parent=1 // pred_check_branch
      %33 = sbr.rel (0) target = $region21
    $region20: #{tpu_custom_call.1} parent=1 // pred_region
      _
    $region21: #{tpu_custom_call.1} parent=1 // pred_fallthru
      _
    // Predicated region
    $region22: #{tpu_custom_call.1} parent=1 // pred_check
      _
    $region23: #{tpu_custom_call.1} parent=1 // pred_check_branch
      %35 = sbr.rel (0) target = $region25
    $region24: #{tpu_custom_call.1} parent=1 // pred_region
      _
    $region25: #{tpu_custom_call.1} parent=1 // pred_fallthru
      _
    // Predicated region
    $region26: #{tpu_custom_call.1} parent=1 // pred_check
      _
    $region27: #{tpu_custom_call.1} parent=1 // pred_check_branch
      %37 = sbr.rel (0) target = $region29
    $region28: #{tpu_custom_call.1} parent=1 // pred_region
      _
    $region29: #{tpu_custom_call.1} parent=1 // pred_fallthru
      _
    // Predicated region
    $region30: #{tpu_custom_call.1} parent=1 // pred_check
      _
    $region31: #{tpu_custom_call.1} parent=1 // pred_check_branch
      %39 = sbr.rel (0) target = $region33
    $region32: #{tpu_custom_call.1} parent=1 // pred_region
      _
    $region33: #{tpu_custom_call.1} parent=1 // pred_fallthru
      _
    // Predicated region
    $region34: #{tpu_custom_call.1} parent=1 // pred_check
      _
    $region35: #{tpu_custom_call.1} parent=1 // pred_check_branch
      %41 = sbr.rel (0) target = $region37
    $region36: #{tpu_custom_call.1} parent=1 // pred_region
      _
    $region37: #{tpu_custom_call.1} parent=1 // pred_fallthru
      _
    // Predicated region
    $region38: #{tpu_custom_call.1} parent=1 // pred_check
      _
    $region39: #{tpu_custom_call.1} parent=1 // pred_check_branch
      %43 = sbr.rel (0) target = $region41
    $region40: #{tpu_custom_call.1} parent=1 // pred_region
      _
    $region41: #{tpu_custom_call.1} parent=1 // pred_fallthru
      _
    // Predicated region
    $region42: #{tpu_custom_call.1} parent=1 // pred_check
      _
    $region43: #{tpu_custom_call.1} parent=1 // pred_check_branch
      %45 = sbr.rel (0) target = $region45
    $region44: #{tpu_custom_call.1} parent=1 // pred_region
      _
    $region45: #{tpu_custom_call.1} parent=1 // pred_fallthru
      _
    // Predicated region
    $region46: #{tpu_custom_call.1} parent=1 // pred_check
      _
    $region47: #{tpu_custom_call.1} parent=1 // pred_check_branch
      %47 = sbr.rel (0) target = $region49
    $region48: #{tpu_custom_call.1} parent=1 // pred_region
      _
    $region49: #{tpu_custom_call.1} parent=1 // pred_fallthru
      _
    // Predicated region
    $region50: #{tpu_custom_call.1} parent=1 // pred_check
      _
    $region51: #{tpu_custom_call.1} parent=1 // pred_check_branch
      %49 = sbr.rel (0) target = $region53
    $region52: #{tpu_custom_call.1} parent=1 // pred_region
      _
    $region53: #{tpu_custom_call.1} parent=1 // pred_fallthru
      _
    %v50 = vld [vmem:[%s0] sm:$0xff]
    %v51 = vld [vmem:[%s0 + $0x8] sm:$0xff]
    %v52 = vld [vmem:[%s0 + $0x10] sm:$0xff]
    %v53 = vld [vmem:[%s0 + $0x18] sm:$0xff]
    %v54 = vld [vmem:[%s0 + $0x20] sm:$0xff]
    %v55 = vld [vmem:[%s0 + $0x28] sm:$0xff]
    %v56 = vld [vmem:[%s0 + $0x30] sm:$0xff]
    %v57 = vld [vmem:[%s0 + $0x38] sm:$0xff]
    %v58 = vld [vmem:[%s0 + $0x40] sm:$0xff]
    %v59 = vld [vmem:[%s0 + $0x48] sm:$0xff]
    %v60 = vld [vmem:[%s0 + $0x50] sm:$0xff]
    %v61 = vld [vmem:[%s0 + $0x58] sm:$0xff]
    %v62 = vld [vmem:[%s0 + $0x60] sm:$0xff]
    %v63 = vld [vmem:[%s0 + $0x68] sm:$0xff]
    %v64 = vld [vmem:[%s0 + $0x70] sm:$0xff]
    %v65 = vld [vmem:[%s0 + $0x78] sm:$0xff]
    %v66 = vld [vmem:[%s2] sm:$0xff]
    %v67 = vld [vmem:[%s2 + $0x8] sm:$0xff]
    %v68 = vld [vmem:[%s2 + $0x10] sm:$0xff]
    %v69 = vld [vmem:[%s2 + $0x18] sm:$0xff]
    %v70 = vld [vmem:[%s3] sm:$0xff]
    %v71 = vld [vmem:[%s3 + $0x8] sm:$0xff]
    %v72 = vld [vmem:[%s3 + $0x10] sm:$0xff]
    %v73 = vld [vmem:[%s3 + $0x18] sm:$0xff]
    %75 = vset.pattern.permute.xlu0 0
    %76 = vperm.xlu0 %75, %v70
    %v77 = vpop.permute.xlu0 %76
    %80 = vset.pattern.permute.xlu0 0
    %81 = vperm.xlu0 %80, %v71
    %v82 = vpop.permute.xlu0 %81
    %85 = vset.pattern.permute.xlu0 0
    %86 = vperm.xlu0 %85, %v72
    %v87 = vpop.permute.xlu0 %86
    %90 = vset.pattern.permute.xlu0 0
    %91 = vperm.xlu0 %90, %v73
    %v92 = vpop.permute.xlu0 %91
    %vm94 = vcmask 130048
    %v96 = vsel %vm94, %v66, 0
    %v99 = vsel %vm94, %v67, 0
    %v102 = vsel %vm94, %v68, 0
    %v105 = vsel %vm94, %v69, 0
    %v108 = vsel %vm94, %v50, 0
    %v111 = vsel %vm94, %v51, 0
    %v114 = vsel %vm94, %v52, 0
    %v117 = vsel %vm94, %v53, 0
    %v120 = vsel %vm94, %v54, 0
    %v123 = vsel %vm94, %v55, 0
    %v126 = vsel %vm94, %v56, 0
    %v129 = vsel %vm94, %v57, 0
    %v132 = vsel %vm94, %v58, 0
    %v135 = vsel %vm94, %v59, 0
    %v138 = vsel %vm94, %v60, 0
    %v141 = vsel %vm94, %v61, 0
    %v144 = vsel %vm94, %v62, 0
    %v147 = vsel %vm94, %v63, 0
    %v150 = vsel %vm94, %v64, 0
    %v153 = vsel %vm94, %v65, 0
    %155 = vmatprep.subr.mxu0 0.0
    %156 = vmatpush1.xpose.msra.mxu0 %v153
    %157 = vmatprep.subr.mxu0 0.0
    %158 = vmatpush1.xpose.msra.mxu0 %v150
    %159 = vmatprep.subr.mxu0 0.0
    %160 = vmatpush1.xpose.msra.mxu0 %v147
    %161 = vmatprep.subr.mxu0 0.0
    %162 = vmatpush1.xpose.msra.mxu0 %v144
    %163 = vmatprep.subr.mxu0 0.0
    %164 = vmatpush1.xpose.msra.mxu0 %v141
    %165 = vmatprep.subr.mxu0 0.0
    %166 = vmatpush1.xpose.msra.mxu0 %v138
    %167 = vmatprep.subr.mxu0 0.0
    %168 = vmatpush1.xpose.msra.mxu0 %v135
    %169 = vmatprep.subr.mxu0 0.0
    %170 = vmatpush1.xpose.msra.mxu0 %v132
    %171 = vmatprep.subr.mxu0 0.0
    %172 = vmatpush1.xpose.msra.mxu0 %v129
    %173 = vmatprep.subr.mxu0 0.0
    %174 = vmatpush1.xpose.msra.mxu0 %v126
    %175 = vmatprep.subr.mxu0 0.0
    %176 = vmatpush1.xpose.msra.mxu0 %v123
    %177 = vmatprep.subr.mxu0 0.0
    %178 = vmatpush1.xpose.msra.mxu0 %v120
    %179 = vmatprep.subr.mxu0 0.0
    %180 = vmatpush1.xpose.msra.mxu0 %v117
    %181 = vmatprep.subr.mxu0 0.0
    %182 = vmatpush1.xpose.msra.mxu0 %v114
    %183 = vmatprep.subr.mxu0 0.0
    %184 = vmatpush1.xpose.msra.mxu0 %v111
    %185 = vmatprep.subr.mxu0 0.0
    %186 = vmatpush1.xpose.msra.mxu0 %v108
    %187 = vmatprep.subr.mxu0 0.0
    %188 = vmatpush2.xpose.msra.mxu0 0.0
    %189 = vmatprep.subr.mxu0 0.0
    %190 = vmatpush2.xpose.msra.mxu0 0.0
    %191 = vmatprep.subr.mxu0 0.0
    %192 = vmatpush2.xpose.msra.mxu0 0.0
    %193 = vmatprep.subr.mxu0 0.0
    %194 = vmatpush2.xpose.msra.mxu0 0.0
    %195 = vmatprep.subr.mxu0 0.0
    %196 = vmatpush2.xpose.msra.mxu0 0.0
    %197 = vmatprep.subr.mxu0 0.0
    %198 = vmatpush2.xpose.msra.mxu0 0.0
    %199 = vmatprep.subr.mxu0 0.0
    %200 = vmatpush2.xpose.msra.mxu0 0.0
    %201 = vmatprep.subr.mxu0 0.0
    %202 = vmatpush2.xpose.msra.mxu0 0.0
    %203 = vmatprep.subr.mxu0 0.0
    %204 = vmatpush2.xpose.msra.mxu0 0.0
    %205 = vmatprep.subr.mxu0 0.0
    %206 = vmatpush2.xpose.msra.mxu0 0.0
    %207 = vmatprep.subr.mxu0 0.0
    %208 = vmatpush2.xpose.msra.mxu0 0.0
    %209 = vmatprep.subr.mxu0 0.0
    %210 = vmatpush2.xpose.msra.mxu0 0.0
    %211 = vmatprep.subr.mxu0 0.0
    %212 = vmatpush2.xpose.msra.mxu0 0.0
    %213 = vmatprep.subr.mxu0 0.0
    %214 = vmatpush2.xpose.msra.mxu0 0.0
    %215 = vmatprep.subr.mxu0 0.0
    %216 = vmatpush2.xpose.msra.mxu0 0.0
    %217 = vmatprep.subr.mxu0 0.0
    %218 = vmatpush2.xpose.msra.mxu0 0.0
    %219 = vmatprep.mubr.f32.mxu0 0.0
    %220 = vmatmul.mubr.f32.gmra.mxu0 %v96
    %v221 = vpop.f32.mrf.mxu0
    %v222 = vadd.f32 %v77, %v221
    %v223 = vpop.f32.mrf.mxu0
    %224 = vmatprep.mubr.f32.mxu0 0.0
    %225 = vmatmul.mubr.f32.gmra.mxu0 %v99
    %v226 = vpop.f32.mrf.mxu0
    %v227 = vadd.f32 %v82, %v226
    %v228 = vpop.f32.mrf.mxu0
    %229 = vmatprep.mubr.f32.mxu0 0.0
    %230 = vmatmul.mubr.f32.gmra.mxu0 %v102
    %v231 = vpop.f32.mrf.mxu0
    %v232 = vadd.f32 %v87, %v231
    %v233 = vpop.f32.mrf.mxu0
    %234 = vmatprep.mubr.f32.mxu0 0.0
    %235 = vmatmul.mubr.f32.gmra.mxu0 %v105
    %v236 = vpop.f32.mrf.mxu0
    %v237 = vadd.f32 %v92, %v236
    %v238 = vpop.f32.mrf.mxu0
    %239 = vdwg.mxu0
    %v240 = vmax.f32 %v222, 0.0
    %v241 = vmax.f32 %v227, 0.0
    %v242 = vmax.f32 %v232, 0.0
    %v243 = vmax.f32 %v237, 0.0
    %v244 = vld [vmem:[%s4] sm:$0xff]
    %v245 = vld [vmem:[%s4 + $0x8] sm:$0xff]
    %v246 = vld [vmem:[%s4 + $0x10] sm:$0xff]
    %v247 = vld [vmem:[%s4 + $0x18] sm:$0xff]
    %v248 = vld [vmem:[%s4 + $0x20] sm:$0xff]
    %v249 = vld [vmem:[%s4 + $0x28] sm:$0xff]
    %v250 = vld [vmem:[%s4 + $0x30] sm:$0xff]
    %v251 = vld [vmem:[%s4 + $0x38] sm:$0xff]
    %v252 = vld [vmem:[%s5] sm:$0xff]
    %v253 = vld [vmem:[%s5 + $0x8] sm:$0xff]
    %v254 = vld [vmem:[%s5 + $0x10] sm:$0xff]
    %v255 = vld [vmem:[%s5 + $0x18] sm:$0xff]
    %v256 = vld [vmem:[%s5 + $0x20] sm:$0xff]
    %v257 = vld [vmem:[%s5 + $0x28] sm:$0xff]
    %v258 = vld [vmem:[%s5 + $0x30] sm:$0xff]
    %v259 = vld [vmem:[%s5 + $0x38] sm:$0xff]
    %261 = vset.pattern.permute.xlu0 0
    %262 = vperm.xlu0 %261, %v252
    %v263 = vpop.permute.xlu0 %262
    %266 = vset.pattern.permute.xlu0 0
    %267 = vperm.xlu0 %266, %v253
    %v268 = vpop.permute.xlu0 %267
    %271 = vset.pattern.permute.xlu0 0
    %272 = vperm.xlu0 %271, %v254
    %v273 = vpop.permute.xlu0 %272
    %276 = vset.pattern.permute.xlu0 0
    %277 = vperm.xlu0 %276, %v255
    %v278 = vpop.permute.xlu0 %277
    %281 = vset.pattern.permute.xlu0 0
    %282 = vperm.xlu0 %281, %v256
    %v283 = vpop.permute.xlu0 %282
    %286 = vset.pattern.permute.xlu0 0
    %287 = vperm.xlu0 %286, %v257
    %v288 = vpop.permute.xlu0 %287
    %291 = vset.pattern.permute.xlu0 0
    %292 = vperm.xlu0 %291, %v258
    %v293 = vpop.permute.xlu0 %292
    %296 = vset.pattern.permute.xlu0 0
    %297 = vperm.xlu0 %296, %v259
    %v298 = vpop.permute.xlu0 %297
    %vm300 = vcmask 261120
    %v302 = vsel %vm300, %v244, 0
    %v305 = vsel %vm300, %v245, 0
    %v308 = vsel %vm300, %v246, 0
    %v311 = vsel %vm300, %v247, 0
    %v314 = vsel %vm300, %v248, 0
    %v317 = vsel %vm300, %v249, 0
    %v320 = vsel %vm300, %v250, 0
    %v323 = vsel %vm300, %v251, 0
    %325 = vmatprep.subr.mxu0 0.0
    %326 = vmatpush1.msra.mxu0 0.0
    %327 = vmatprep.subr.mxu0 0.0
    %328 = vmatpush1.msra.mxu0 0.0
    %329 = vmatprep.subr.mxu0 0.0
    %330 = vmatpush1.msra.mxu0 0.0
    %331 = vmatprep.subr.mxu0 0.0
    %332 = vmatpush1.msra.mxu0 0.0
    %333 = vmatprep.subr.mxu0 0.0
    %334 = vmatpush1.msra.mxu0 0.0
    %335 = vmatprep.subr.mxu0 0.0
    %336 = vmatpush1.msra.mxu0 0.0
    %337 = vmatprep.subr.mxu0 0.0
    %338 = vmatpush1.msra.mxu0 0.0
    %339 = vmatprep.subr.mxu0 0.0
    %340 = vmatpush1.msra.mxu0 0.0
    %341 = vmatprep.subr.mxu0 0.0
    %342 = vmatpush1.msra.mxu0 0.0
    %343 = vmatprep.subr.mxu0 0.0
    %344 = vmatpush1.msra.mxu0 0.0
    %345 = vmatprep.subr.mxu0 0.0
    %346 = vmatpush1.msra.mxu0 0.0
    %347 = vmatprep.subr.mxu0 0.0
    %348 = vmatpush1.msra.mxu0 0.0
    %349 = vmatprep.subr.mxu0 0.0
    %350 = vmatpush1.msra.mxu0 %v243
    %351 = vmatprep.subr.mxu0 0.0
    %352 = vmatpush1.msra.mxu0 %v242
    %353 = vmatprep.subr.mxu0 0.0
    %354 = vmatpush1.msra.mxu0 %v241
    %355 = vmatprep.subr.mxu0 0.0
    %356 = vmatpush1.msra.mxu0 %v240
    %357 = vmatprep.subr.mxu0 0.0
    %358 = vmatpush2.msra.mxu0 0.0
    %359 = vmatprep.subr.mxu0 0.0
    %360 = vmatpush2.msra.mxu0 0.0
    %361 = vmatprep.subr.mxu0 0.0
    %362 = vmatpush2.msra.mxu0 0.0
    %363 = vmatprep.subr.mxu0 0.0
    %364 = vmatpush2.msra.mxu0 0.0
    %365 = vmatprep.subr.mxu0 0.0
    %366 = vmatpush2.msra.mxu0 0.0
    %367 = vmatprep.subr.mxu0 0.0
    %368 = vmatpush2.msra.mxu0 0.0
    %369 = vmatprep.subr.mxu0 0.0
    %370 = vmatpush2.msra.mxu0 0.0
    %371 = vmatprep.subr.mxu0 0.0
    %372 = vmatpush2.msra.mxu0 0.0
    %373 = vmatprep.subr.mxu0 0.0
    %374 = vmatpush2.msra.mxu0 0.0
    %375 = vmatprep.subr.mxu0 0.0
    %376 = vmatpush2.msra.mxu0 0.0
    %377 = vmatprep.subr.mxu0 0.0
    %378 = vmatpush2.msra.mxu0 0.0
    %379 = vmatprep.subr.mxu0 0.0
    %380 = vmatpush2.msra.mxu0 0.0
    %381 = vmatprep.subr.mxu0 0.0
    %382 = vmatpush2.msra.mxu0 0.0
    %383 = vmatprep.subr.mxu0 0.0
    %384 = vmatpush2.msra.mxu0 0.0
    %385 = vmatprep.subr.mxu0 0.0
    %386 = vmatpush2.msra.mxu0 0.0
    %387 = vmatprep.subr.mxu0 0.0
    %388 = vmatpush2.msra.mxu0 0.0
    %389 = vmatprep.mubr.f32.mxu0 0.0
    %390 = vmatmul.mubr.f32.gmra.mxu0 %v302
    %v391 = vpop.f32.mrf.mxu0
    %v392 = vadd.f32 %v263, %v391
    %v393 = vpop.f32.mrf.mxu0
    %394 = vmatprep.mubr.f32.mxu0 0.0
    %395 = vmatmul.mubr.f32.gmra.mxu0 %v305
    %v396 = vpop.f32.mrf.mxu0
    %v397 = vadd.f32 %v268, %v396
    %v398 = vpop.f32.mrf.mxu0
    %399 = vmatprep.mubr.f32.mxu0 0.0
    %400 = vmatmul.mubr.f32.gmra.mxu0 %v308
    %v401 = vpop.f32.mrf.mxu0
    %v402 = vadd.f32 %v273, %v401
    %v403 = vpop.f32.mrf.mxu0
    %404 = vmatprep.mubr.f32.mxu0 0.0
    %405 = vmatmul.mubr.f32.gmra.mxu0 %v311
    %v406 = vpop.f32.mrf.mxu0
    %v407 = vadd.f32 %v278, %v406
    %v408 = vpop.f32.mrf.mxu0
    %409 = vmatprep.mubr.f32.mxu0 0.0
    %410 = vmatmul.mubr.f32.gmra.mxu0 %v314
    %v411 = vpop.f32.mrf.mxu0
    %v412 = vadd.f32 %v283, %v411
    %v413 = vpop.f32.mrf.mxu0
    %414 = vmatprep.mubr.f32.mxu0 0.0
    %415 = vmatmul.mubr.f32.gmra.mxu0 %v317
    %v416 = vpop.f32.mrf.mxu0
    %v417 = vadd.f32 %v288, %v416
    %v418 = vpop.f32.mrf.mxu0
    %419 = vmatprep.mubr.f32.mxu0 0.0
    %420 = vmatmul.mubr.f32.gmra.mxu0 %v320
    %v421 = vpop.f32.mrf.mxu0
    %v422 = vadd.f32 %v293, %v421
    %v423 = vpop.f32.mrf.mxu0
    %424 = vmatprep.mubr.f32.mxu0 0.0
    %425 = vmatmul.mubr.f32.gmra.mxu0 %v323
    %v426 = vpop.f32.mrf.mxu0
    %v427 = vadd.f32 %v298, %v426
    %v428 = vpop.f32.mrf.mxu0
    %429 = vdwg.mxu0
    %v430 = vmax.f32 %v392, 0.0
    %v431 = vmax.f32 %v397, 0.0
    %v432 = vmax.f32 %v402, 0.0
    %v433 = vmax.f32 %v407, 0.0
    %v434 = vmax.f32 %v412, 0.0
    %v435 = vmax.f32 %v417, 0.0
    %v436 = vmax.f32 %v422, 0.0
    %v437 = vmax.f32 %v427, 0.0
    %v438 = vld [vmem:[%s6] sm:$0xff]
    %v439 = vld [vmem:[%s6 + $0x8] sm:$0xff]
    %v440 = vld [vmem:[%s6 + $0x10] sm:$0xff]
    %v441 = vld [vmem:[%s6 + $0x18] sm:$0xff]
    %v442 = vld [vmem:[%s7] sm:$0xff]
    %v443 = vld [vmem:[%s7 + $0x8] sm:$0xff]
    %v444 = vld [vmem:[%s7 + $0x10] sm:$0xff]
    %v445 = vld [vmem:[%s7 + $0x18] sm:$0xff]
    %447 = vset.pattern.permute.xlu0 0
    %448 = vperm.xlu0 %447, %v442
    %v449 = vpop.permute.xlu0 %448
    %452 = vset.pattern.permute.xlu0 0
    %453 = vperm.xlu0 %452, %v443
    %v454 = vpop.permute.xlu0 %453
    %457 = vset.pattern.permute.xlu0 0
    %458 = vperm.xlu0 %457, %v444
    %v459 = vpop.permute.xlu0 %458
    %462 = vset.pattern.permute.xlu0 0
    %463 = vperm.xlu0 %462, %v445
    %v464 = vpop.permute.xlu0 %463
    %vm466 = vcmask 523264
    %v468 = vsel %vm466, %v438, 0
    %v471 = vsel %vm466, %v439, 0
    %v474 = vsel %vm466, %v440, 0
    %v477 = vsel %vm466, %v441, 0
    %479 = vmatprep.subr.mxu0 0.0
    %480 = vmatpush1.msra.mxu0 0.0
    %481 = vmatprep.subr.mxu0 0.0
    %482 = vmatpush1.msra.mxu0 0.0
    %483 = vmatprep.subr.mxu0 0.0
    %484 = vmatpush1.msra.mxu0 0.0
    %485 = vmatprep.subr.mxu0 0.0
    %486 = vmatpush1.msra.mxu0 0.0
    %487 = vmatprep.subr.mxu0 0.0
    %488 = vmatpush1.msra.mxu0 0.0
    %489 = vmatprep.subr.mxu0 0.0
    %490 = vmatpush1.msra.mxu0 0.0
    %491 = vmatprep.subr.mxu0 0.0
    %492 = vmatpush1.msra.mxu0 0.0
    %493 = vmatprep.subr.mxu0 0.0
    %494 = vmatpush1.msra.mxu0 0.0
    %495 = vmatprep.subr.mxu0 0.0
    %496 = vmatpush1.msra.mxu0 %v437
    %497 = vmatprep.subr.mxu0 0.0
    %498 = vmatpush1.msra.mxu0 %v436
    %499 = vmatprep.subr.mxu0 0.0
    %500 = vmatpush1.msra.mxu0 %v435
    %501 = vmatprep.subr.mxu0 0.0
    %502 = vmatpush1.msra.mxu0 %v434
    %503 = vmatprep.subr.mxu0 0.0
    %504 = vmatpush1.msra.mxu0 %v433
    %505 = vmatprep.subr.mxu0 0.0
    %506 = vmatpush1.msra.mxu0 %v432
    %507 = vmatprep.subr.mxu0 0.0
    %508 = vmatpush1.msra.mxu0 %v431
    %509 = vmatprep.subr.mxu0 0.0
    %510 = vmatpush1.msra.mxu0 %v430
    %511 = vmatprep.subr.mxu0 0.0
    %512 = vmatpush2.msra.mxu0 0.0
    %513 = vmatprep.subr.mxu0 0.0
    %514 = vmatpush2.msra.mxu0 0.0
    %515 = vmatprep.subr.mxu0 0.0
    %516 = vmatpush2.msra.mxu0 0.0
    %517 = vmatprep.subr.mxu0 0.0
    %518 = vmatpush2.msra.mxu0 0.0
    %519 = vmatprep.subr.mxu0 0.0
    %520 = vmatpush2.msra.mxu0 0.0
    %521 = vmatprep.subr.mxu0 0.0
    %522 = vmatpush2.msra.mxu0 0.0
    %523 = vmatprep.subr.mxu0 0.0
    %524 = vmatpush2.msra.mxu0 0.0
    %525 = vmatprep.subr.mxu0 0.0
    %526 = vmatpush2.msra.mxu0 0.0
    %527 = vmatprep.subr.mxu0 0.0
    %528 = vmatpush2.msra.mxu0 0.0
    %529 = vmatprep.subr.mxu0 0.0
    %530 = vmatpush2.msra.mxu0 0.0
    %531 = vmatprep.subr.mxu0 0.0
    %532 = vmatpush2.msra.mxu0 0.0
    %533 = vmatprep.subr.mxu0 0.0
    %534 = vmatpush2.msra.mxu0 0.0
    %535 = vmatprep.subr.mxu0 0.0
    %536 = vmatpush2.msra.mxu0 0.0
    %537 = vmatprep.subr.mxu0 0.0
    %538 = vmatpush2.msra.mxu0 0.0
    %539 = vmatprep.subr.mxu0 0.0
    %540 = vmatpush2.msra.mxu0 0.0
    %541 = vmatprep.subr.mxu0 0.0
    %542 = vmatpush2.msra.mxu0 0.0
    %543 = vmatprep.mubr.f32.mxu0 0.0
    %544 = vmatmul.mubr.f32.gmra.mxu0 %v468
    %v545 = vpop.f32.mrf.mxu0
    %v546 = vadd.f32 %v449, %v545
    %v547 = vpop.f32.mrf.mxu0
    %548 = vmatprep.mubr.f32.mxu0 0.0
    %549 = vmatmul.mubr.f32.gmra.mxu0 %v471
    %v550 = vpop.f32.mrf.mxu0
    %v551 = vadd.f32 %v454, %v550
    %v552 = vpop.f32.mrf.mxu0
    %553 = vmatprep.mubr.f32.mxu0 0.0
    %554 = vmatmul.mubr.f32.gmra.mxu0 %v474
    %v555 = vpop.f32.mrf.mxu0
    %v556 = vadd.f32 %v459, %v555
    %v557 = vpop.f32.mrf.mxu0
    %558 = vmatprep.mubr.f32.mxu0 0.0
    %559 = vmatmul.mubr.f32.gmra.mxu0 %v477
    %v560 = vpop.f32.mrf.mxu0
    %v561 = vadd.f32 %v464, %v560
    %v562 = vpop.f32.mrf.mxu0
    %563 = vdwg.mxu0
    %v564 = vmax.f32 %v546, 0.0
    %v565 = vmax.f32 %v551, 0.0
    %v566 = vmax.f32 %v556, 0.0
    %v567 = vmax.f32 %v561, 0.0
    %v568 = vld [vmem:[%s8] sm:$0xff]
    %v569 = vld [vmem:[%s9] sm:$0xff]
    %571 = vset.pattern.permute.xlu0 0
    %572 = vperm.xlu0 %571, %v569
    %v573 = vpop.permute.xlu0 %572
    %v576 = vsel %vm300, %v568, 0
    %578 = vmatprep.subr.mxu0 0.0
    %579 = vmatpush1.msra.mxu0 0.0
    %580 = vmatprep.subr.mxu0 0.0
    %581 = vmatpush1.msra.mxu0 0.0
    %582 = vmatprep.subr.mxu0 0.0
    %583 = vmatpush1.msra.mxu0 0.0
    %584 = vmatprep.subr.mxu0 0.0
    %585 = vmatpush1.msra.mxu0 0.0
    %586 = vmatprep.subr.mxu0 0.0
    %587 = vmatpush1.msra.mxu0 0.0
    %588 = vmatprep.subr.mxu0 0.0
    %589 = vmatpush1.msra.mxu0 0.0
    %590 = vmatprep.subr.mxu0 0.0
    %591 = vmatpush1.msra.mxu0 0.0
    %592 = vmatprep.subr.mxu0 0.0
    %593 = vmatpush1.msra.mxu0 0.0
    %594 = vmatprep.subr.mxu0 0.0
    %595 = vmatpush1.msra.mxu0 0.0
    %596 = vmatprep.subr.mxu0 0.0
    %597 = vmatpush1.msra.mxu0 0.0
    %598 = vmatprep.subr.mxu0 0.0
    %599 = vmatpush1.msra.mxu0 0.0
    %600 = vmatprep.subr.mxu0 0.0
    %601 = vmatpush1.msra.mxu0 0.0
    %602 = vmatprep.subr.mxu0 0.0
    %603 = vmatpush1.msra.mxu0 %v567
    %604 = vmatprep.subr.mxu0 0.0
    %605 = vmatpush1.msra.mxu0 %v566
    %606 = vmatprep.subr.mxu0 0.0
    %607 = vmatpush1.msra.mxu0 %v565
    %608 = vmatprep.subr.mxu0 0.0
    %609 = vmatpush1.msra.mxu0 %v564
    %610 = vmatprep.subr.mxu0 0.0
    %611 = vmatpush2.msra.mxu0 0.0
    %612 = vmatprep.subr.mxu0 0.0
    %613 = vmatpush2.msra.mxu0 0.0
    %614 = vmatprep.subr.mxu0 0.0
    %615 = vmatpush2.msra.mxu0 0.0
    %616 = vmatprep.subr.mxu0 0.0
    %617 = vmatpush2.msra.mxu0 0.0
    %618 = vmatprep.subr.mxu0 0.0
    %619 = vmatpush2.msra.mxu0 0.0
    %620 = vmatprep.subr.mxu0 0.0
    %621 = vmatpush2.msra.mxu0 0.0
    %622 = vmatprep.subr.mxu0 0.0
    %623 = vmatpush2.msra.mxu0 0.0
    %624 = vmatprep.subr.mxu0 0.0
    %625 = vmatpush2.msra.mxu0 0.0
    %626 = vmatprep.subr.mxu0 0.0
    %627 = vmatpush2.msra.mxu0 0.0
    %628 = vmatprep.subr.mxu0 0.0
    %629 = vmatpush2.msra.mxu0 0.0
    %630 = vmatprep.subr.mxu0 0.0
    %631 = vmatpush2.msra.mxu0 0.0
    %632 = vmatprep.subr.mxu0 0.0
    %633 = vmatpush2.msra.mxu0 0.0
    %634 = vmatprep.subr.mxu0 0.0
    %635 = vmatpush2.msra.mxu0 0.0
    %636 = vmatprep.subr.mxu0 0.0
    %637 = vmatpush2.msra.mxu0 0.0
    %638 = vmatprep.subr.mxu0 0.0
    %639 = vmatpush2.msra.mxu0 0.0
    %640 = vmatprep.subr.mxu0 0.0
    %641 = vmatpush2.msra.mxu0 0.0
    %642 = vmatprep.mubr.f32.mxu0 0.0
    %643 = vmatmul.mubr.f32.gmra.mxu0 %v576
    %v644 = vpop.f32.mrf.mxu0
    %v645 = vadd.f32 %v573, %v644
    %v646 = vpop.f32.mrf.mxu0
    %647 = vdwg.mxu0
    %v648 = vtanh.pop %v645
    %649 = vst [vmem:[#allocation3] sm:$0xff] %v648
    %v650 = vld [vmem:[%s10] sm:$0xff]
    %v651 = vld [vmem:[%s1] sm:$0xff]
    %v652 = vld [vmem:[%s1 + $0x8] sm:$0xff]
    %v653 = vld [vmem:[%s1 + $0x10] sm:$0xff]
    %v654 = vld [vmem:[%s1 + $0x18] sm:$0xff]
    %v655 = vld [vmem:[%s1 + $0x20] sm:$0xff]
    %v656 = vld [vmem:[%s1 + $0x28] sm:$0xff]
    %v657 = vld [vmem:[%s1 + $0x30] sm:$0xff]
    %v658 = vld [vmem:[%s1 + $0x38] sm:$0xff]
    %v659 = vld [vmem:[%s1 + $0x40] sm:$0xff]
    %v660 = vld [vmem:[%s1 + $0x48] sm:$0xff]
    %v661 = vld [vmem:[%s1 + $0x50] sm:$0xff]
    %v662 = vld [vmem:[%s1 + $0x58] sm:$0xff]
    %v663 = vld [vmem:[%s1 + $0x60] sm:$0xff]
    %v664 = vld [vmem:[%s1 + $0x68] sm:$0xff]
    %v665 = vld [vmem:[%s1 + $0x70] sm:$0xff]
    %v666 = vld [vmem:[%s1 + $0x78] sm:$0xff]
    %vm667 = vcmask 64512
    %v669 = vsel %vm667, %v650, 0
    %v672 = vsel %vm667, %v651, 0
    %v675 = vsel %vm667, %v652, 0
    %v678 = vsel %vm667, %v653, 0
    %v681 = vsel %vm667, %v654, 0
    %v684 = vsel %vm667, %v655, 0
    %v687 = vsel %vm667, %v656, 0
    %v690 = vsel %vm667, %v657, 0
    %v693 = vsel %vm667, %v658, 0
    %v696 = vsel %vm667, %v659, 0
    %v699 = vsel %vm667, %v660, 0
    %v702 = vsel %vm667, %v661, 0
    %v705 = vsel %vm667, %v662, 0
    %v708 = vsel %vm667, %v663, 0
    %v711 = vsel %vm667, %v664, 0
    %v714 = vsel %vm667, %v665, 0
    %v717 = vsel %vm667, %v666, 0
    %719 = vmatprep.subr.mxu0 0.0
    %720 = vmatpush1.xpose.msra.mxu0 %v717
    %721 = vmatprep.subr.mxu0 0.0
    %722 = vmatpush1.xpose.msra.mxu0 %v714
    %723 = vmatprep.subr.mxu0 0.0
    %724 = vmatpush1.xpose.msra.mxu0 %v711
    %725 = vmatprep.subr.mxu0 0.0
    %726 = vmatpush1.xpose.msra.mxu0 %v708
    %727 = vmatprep.subr.mxu0 0.0
    %728 = vmatpush1.xpose.msra.mxu0 %v705
    %729 = vmatprep.subr.mxu0 0.0
    %730 = vmatpush1.xpose.msra.mxu0 %v702
    %731 = vmatprep.subr.mxu0 0.0
    %732 = vmatpush1.xpose.msra.mxu0 %v699
    %733 = vmatprep.subr.mxu0 0.0
    %734 = vmatpush1.xpose.msra.mxu0 %v696
    %735 = vmatprep.subr.mxu0 0.0
    %736 = vmatpush1.xpose.msra.mxu0 %v693
    %737 = vmatprep.subr.mxu0 0.0
    %738 = vmatpush1.xpose.msra.mxu0 %v690
    %739 = vmatprep.subr.mxu0 0.0
    %740 = vmatpush1.xpose.msra.mxu0 %v687
    %741 = vmatprep.subr.mxu0 0.0
    %742 = vmatpush1.xpose.msra.mxu0 %v684
    %743 = vmatprep.subr.mxu0 0.0
    %744 = vmatpush1.xpose.msra.mxu0 %v681
    %745 = vmatprep.subr.mxu0 0.0
    %746 = vmatpush1.xpose.msra.mxu0 %v678
    %747 = vmatprep.subr.mxu0 0.0
    %748 = vmatpush1.xpose.msra.mxu0 %v675
    %749 = vmatprep.subr.mxu0 0.0
    %750 = vmatpush1.xpose.msra.mxu0 %v672
    %751 = vmatprep.subr.mxu0 0.0
    %752 = vmatpush2.xpose.msra.mxu0 0.0
    %753 = vmatprep.subr.mxu0 0.0
    %754 = vmatpush2.xpose.msra.mxu0 0.0
    %755 = vmatprep.subr.mxu0 0.0
    %756 = vmatpush2.xpose.msra.mxu0 0.0
    %757 = vmatprep.subr.mxu0 0.0
    %758 = vmatpush2.xpose.msra.mxu0 0.0
    %759 = vmatprep.subr.mxu0 0.0
    %760 = vmatpush2.xpose.msra.mxu0 0.0
    %761 = vmatprep.subr.mxu0 0.0
    %762 = vmatpush2.xpose.msra.mxu0 0.0
    %763 = vmatprep.subr.mxu0 0.0
    %764 = vmatpush2.xpose.msra.mxu0 0.0
    %765 = vmatprep.subr.mxu0 0.0
    %766 = vmatpush2.xpose.msra.mxu0 0.0
    %767 = vmatprep.subr.mxu0 0.0
    %768 = vmatpush2.xpose.msra.mxu0 0.0
    %769 = vmatprep.subr.mxu0 0.0
    %770 = vmatpush2.xpose.msra.mxu0 0.0
    %771 = vmatprep.subr.mxu0 0.0
    %772 = vmatpush2.xpose.msra.mxu0 0.0
    %773 = vmatprep.subr.mxu0 0.0
    %774 = vmatpush2.xpose.msra.mxu0 0.0
    %775 = vmatprep.subr.mxu0 0.0
    %776 = vmatpush2.xpose.msra.mxu0 0.0
    %777 = vmatprep.subr.mxu0 0.0
    %778 = vmatpush2.xpose.msra.mxu0 0.0
    %779 = vmatprep.subr.mxu0 0.0
    %780 = vmatpush2.xpose.msra.mxu0 0.0
    %781 = vmatprep.subr.mxu0 0.0
    %782 = vmatpush2.xpose.msra.mxu0 0.0
    %783 = vmatprep.mubr.f32.mxu0 0.0
    %784 = vmatmul.mubr.f32.gmra.mxu0 %v669
    %v785 = vpop.f32.mrf.mxu0
    %v786 = vadd.f32 0.0, %v785
    %v787 = vpop.f32.mrf.mxu0
    %788 = vdwg.mxu0
    %v789 = vsub.f32 %v786, %v648
    %v790 = vld [vmem:[%s11] sm:$0x1]
    %v791 = vmul.f32 %v789, %v789
    %v792 = vld [vmem:[#allocation2] sm:$0x1]
    %794 = vset.pattern.permute.xlu0 0
    %795 = vperm.xlu0 %794, %v792
    %v796 = vpop.permute.xlu0 %795
    %v798 = vlaneseq
    %v799 = vshrl.u32 %v798, 7
    %v800 = vsub.s32 0, %v799
    %v801 = vrot.slane %v796, %v800
    %v803 = vsel %vm667, %v790, 0
    %805 = vmatprep.subr.mxu0 0.0
    %806 = vmatpush1.msra.mxu0 0.0
    %807 = vmatprep.subr.mxu0 0.0
    %808 = vmatpush1.msra.mxu0 0.0
    %809 = vmatprep.subr.mxu0 0.0
    %810 = vmatpush1.msra.mxu0 0.0
    %811 = vmatprep.subr.mxu0 0.0
    %812 = vmatpush1.msra.mxu0 0.0
    %813 = vmatprep.subr.mxu0 0.0
    %814 = vmatpush1.msra.mxu0 0.0
    %815 = vmatprep.subr.mxu0 0.0
    %816 = vmatpush1.msra.mxu0 0.0
    %817 = vmatprep.subr.mxu0 0.0
    %818 = vmatpush1.msra.mxu0 0.0
    %819 = vmatprep.subr.mxu0 0.0
    %820 = vmatpush1.msra.mxu0 0.0
    %821 = vmatprep.subr.mxu0 0.0
    %822 = vmatpush1.msra.mxu0 0.0
    %823 = vmatprep.subr.mxu0 0.0
    %824 = vmatpush1.msra.mxu0 0.0
    %825 = vmatprep.subr.mxu0 0.0
    %826 = vmatpush1.msra.mxu0 0.0
    %827 = vmatprep.subr.mxu0 0.0
    %828 = vmatpush1.msra.mxu0 0.0
    %829 = vmatprep.subr.mxu0 0.0
    %830 = vmatpush1.msra.mxu0 0.0
    %831 = vmatprep.subr.mxu0 0.0
    %832 = vmatpush1.msra.mxu0 0.0
    %833 = vmatprep.subr.mxu0 0.0
    %834 = vmatpush1.msra.mxu0 0.0
    %835 = vmatprep.subr.mxu0 0.0
    %836 = vmatpush1.msra.mxu0 %v791
    %837 = vmatprep.subr.mxu0 0.0
    %838 = vmatpush2.msra.mxu0 0.0
    %839 = vmatprep.subr.mxu0 0.0
    %840 = vmatpush2.msra.mxu0 0.0
    %841 = vmatprep.subr.mxu0 0.0
    %842 = vmatpush2.msra.mxu0 0.0
    %843 = vmatprep.subr.mxu0 0.0
    %844 = vmatpush2.msra.mxu0 0.0
    %845 = vmatprep.subr.mxu0 0.0
    %846 = vmatpush2.msra.mxu0 0.0
    %847 = vmatprep.subr.mxu0 0.0
    %848 = vmatpush2.msra.mxu0 0.0
    %849 = vmatprep.subr.mxu0 0.0
    %850 = vmatpush2.msra.mxu0 0.0
    %851 = vmatprep.subr.mxu0 0.0
    %852 = vmatpush2.msra.mxu0 0.0
    %853 = vmatprep.subr.mxu0 0.0
    %854 = vmatpush2.msra.mxu0 0.0
    %855 = vmatprep.subr.mxu0 0.0
    %856 = vmatpush2.msra.mxu0 0.0
    %857 = vmatprep.subr.mxu0 0.0
    %858 = vmatpush2.msra.mxu0 0.0
    %859 = vmatprep.subr.mxu0 0.0
    %860 = vmatpush2.msra.mxu0 0.0
    %861 = vmatprep.subr.mxu0 0.0
    %862 = vmatpush2.msra.mxu0 0.0
    %863 = vmatprep.subr.mxu0 0.0
    %864 = vmatpush2.msra.mxu0 0.0
    %865 = vmatprep.subr.mxu0 0.0
    %866 = vmatpush2.msra.mxu0 0.0
    %867 = vmatprep.subr.mxu0 0.0
    %868 = vmatpush2.msra.mxu0 0.0
    %869 = vmatprep.mubr.f32.mxu0 0.0
    %870 = vmatmul.mubr.f32.gmra.mxu0 %v803
    %v871 = vpop.f32.mrf.mxu0
    %v872 = vadd.f32 %v801, %v871
    %v873 = vpop.f32.mrf.mxu0
    %874 = vdwg.mxu0
    %875 = vst [vmem:[#allocation5] sm:$0x1] %v872
    // Predicated region
    $region54: #{tpu_custom_call.1} parent=1 // pred_check
      _
    $region55: #{tpu_custom_call.1} parent=1 // pred_check_branch
      %877 = sbr.rel (0) target = $region57
    $region56: #{tpu_custom_call.1} parent=1 // pred_region
      %s879 = ssub.s32 128, 128
      %880 = vsyncadd [#allocation4], %s879
      %s882 = sshll.u32 [#allocation3], 4
      %s883 = int_to_ptr.vmem [resolvable:$true] %s882
      %885 = dma.vmem_to_hbm [thread:$0]  %s883, 128, %s13, [#allocation4]
    $region57: #{tpu_custom_call.1} parent=1 // pred_fallthru
      _
    // Predicated region
    $region58: #{tpu_custom_call.1} parent=1 // pred_check
      _
    $region59: #{tpu_custom_call.1} parent=1 // pred_check_branch
      %887 = sbr.rel (0) target = $region61
    $region60: #{tpu_custom_call.1} parent=1 // pred_region
      %s889 = ssub.s32 16, 16
      %890 = vsyncadd [#allocation6], %s889
      %s892 = sshll.u32 [#allocation5], 4
      %s893 = int_to_ptr.vmem [resolvable:$true] %s892
      %895 = dma.vmem_to_hbm [thread:$0]  %s893, 16, %s14, [#allocation6]
    $region61: #{tpu_custom_call.1} parent=1 // pred_fallthru
      _
    // Predicated region
    $region62: #{tpu_custom_call.1} parent=1 // pred_check
      _
    $region63: #{tpu_custom_call.1} parent=1 // pred_check_branch
      %897 = sbr.rel (0) target = $region65
    $region64: #{tpu_custom_call.1} parent=1 // pred_region
      %898 = dma.done [#allocation4], 128
    $region65: #{tpu_custom_call.1} parent=1 // pred_fallthru
      _
    // Predicated region
    $region66: #{tpu_custom_call.1} parent=1 // pred_check
      _
    $region67: #{tpu_custom_call.1} parent=1 // pred_check_branch
      %900 = sbr.rel (0) target = $region69
    $region68: #{tpu_custom_call.1} parent=1 // pred_region
      %901 = dma.done [#allocation6], 16
    $region69: #{tpu_custom_call.1} parent=1 // pred_fallthru
      _
    %902 = vsyncpa [#allocation4], 1
    %903 = vsyncpa [#allocation6], 1

</llo_original>
